<compile_context>
chip_gen: v5e
topology: v5e:2x2
jax: 0.10.0
libtpu: 0.0.40
codegen_flags: <defaults>
</compile_context>

<pallas_src>
import functools

import jax
import jax.numpy as jnp
from jax import lax
from jax.experimental import pallas as pl
from jax.experimental.pallas import tpu as pltpu


def _round_up(x, m):
    return ((x + m - 1) // m) * m


def _embedder_kernel(ids_ref, w_ref, out_ref, *, P, PNC):
    # ids_ref : (P, TILE_R, 1) int32  -- pre-offset ids (id + k*NC) for packed slot k
    # w_ref   : (2, PNC, PD)  bf16    -- hi/lo split of the block-diagonal (soft-clip-folded) table
    # out_ref : (TILE_R, PD)          -- P embeddings packed per 128-lane output row
    R = out_ref.shape[0]
    iota = lax.broadcasted_iota(jnp.int32, (R, PNC), 1)

    # Single fused one-hot over all P packed slots (ids were pre-offset by k*NC).
    hit = ids_ref[0] == iota
    for k in range(1, P):
        hit = hit | (ids_ref[k] == iota)
    onehot = hit.astype(jnp.bfloat16)            # exact in bf16 (0.0 / 1.0)

    # Two single-pass bf16 matmuls, f32 accumulation: exact row selection of hi and lo parts.
    x = jnp.dot(onehot, w_ref[0], preferred_element_type=jnp.float32)
    x = x + jnp.dot(onehot, w_ref[1], preferred_element_type=jnp.float32)

    out_ref[...] = x.astype(out_ref.dtype)


def make_embedder(table, K=None, eps=1e-12, tile_rows=2048, out_dtype=None):
    """Returns apply(indices) -> embeddings, matching Embedder.forward (+ optional soft_clip)."""
    table = jnp.asarray(table, jnp.float32)
    n_classes, D = table.shape
    out_dtype = jnp.dtype(out_dtype) if out_dtype is not None else table.dtype

    # Fold soft_clip into the table: it depends only on the row being looked up.
    if K is not None:
        norm = jnp.linalg.norm(table, axis=-1, keepdims=True)
        table = (table / jnp.maximum(norm, eps)) * (norm + K)

    LANE = 128
    P = LANE // D if (D <= LANE and LANE % D == 0) else 1    # embeddings per 128-lane row
    PD = P * D
    NC = max(8, _round_up(n_classes, 8))                     # padded class count per slot
    PNC = P * NC                                             # fused contraction dim

    # Zero-padded table replicated block-diagonally: slot k occupies rows [k*NC,(k+1)*NC)
    # and lanes [k*D,(k+1)*D) -- one matmul performs all P lookups of an output row.
    table_pad = jnp.zeros((NC, D), jnp.float32).at[:n_classes, :].set(table)
    w_full = jnp.zeros((PNC, PD), jnp.float32)
    for k in range(P):
        w_full = w_full.at[k * NC:(k + 1) * NC, k * D:(k + 1) * D].set(table_pad)

    # bf16 hi/lo split (exact selection via one-hot; residual ~4e-6 relative).
    w_hi = w_full.astype(jnp.bfloat16)
    w_lo = (w_full - w_hi.astype(jnp.float32)).astype(jnp.bfloat16)
    w = jnp.stack([w_hi, w_lo])                              # (2, PNC, PD) bf16

    kernel = functools.partial(_embedder_kernel, P=P, PNC=PNC)

    def _vmem_estimate(tile_r):
        ids_b = P * tile_r * 128 * 4          # conservative: minor dim padded to 128 lanes
        out_b = tile_r * PD * 4
        w_b = 2 * PNC * PD * 2
        tmp_b = 3 * tile_r * max(PD, 128) * 4  # one-hot + matmul temporaries (conservative)
        return 2 * (ids_b + out_b + w_b) + tmp_b

    @jax.jit
    def apply(indices):
        orig_shape = indices.shape
        flat_ids = indices.reshape(-1).astype(jnp.int32)
        N = flat_ids.shape[0]

        R_total = pl.cdiv(N, P)                              # packed output rows needed
        TILE_R = max(8, min(_round_up(tile_rows, 8), _round_up(R_total, 8)))
        # Keep the conservative VMEM footprint bounded (safe on every generation).
        while TILE_R > 8 and _vmem_estimate(TILE_R) > (40 << 20):
            TILE_R = max(8, _round_up(TILE_R // 2, 8))
        grid = (pl.cdiv(R_total, TILE_R),)
        R_pad = grid[0] * TILE_R
        N_pad = R_pad * P

        # Pad with id 0 (rows discarded after unpack), pack P ids per output row and
        # pre-offset slot k by k*NC so the kernel builds one fused one-hot.
        ids = jnp.pad(flat_ids, (0, N_pad - N))
        ids2 = ids.reshape(R_pad, P).T                       # (P, R_pad), ids2[k, r] = id(r*P + k)
        offsets = (jnp.arange(P, dtype=jnp.int32) * NC)[:, None]
        ids3 = (ids2 + offsets).reshape(P, R_pad, 1)

        in_specs = [
            pl.BlockSpec((P, TILE_R, 1), lambda i: (0, i, 0)),   # ids tile
            pl.BlockSpec((2, PNC, PD), lambda i: (0, 0, 0)),     # table (hi/lo), VMEM-resident
        ]

        flops = 2 * 2 * R_pad * PNC * PD                      # two bf16 matmuls
        bytes_accessed = N_pad * 4 + 2 * PNC * PD * 2 + R_pad * PD * jnp.dtype(out_dtype).itemsize
        vmem_limit = int(min(48 << 20, max(16 << 20, _vmem_estimate(TILE_R) + (4 << 20))))

        out = pl.pallas_call(
            kernel,
            out_shape=jax.ShapeDtypeStruct((R_pad, PD), out_dtype),
            grid=grid,
            in_specs=in_specs,
            out_specs=pl.BlockSpec((TILE_R, PD), lambda i: (i, 0)),
            compiler_params=pltpu.CompilerParams(
                dimension_semantics=("parallel",),
                vmem_limit_bytes=vmem_limit,
            ),
            cost_estimate=pl.CostEstimate(
                flops=flops,
                transcendentals=0,
                bytes_accessed=bytes_accessed,
            ),
        )(ids3, w)

        emb = out.reshape(R_pad * P, D)[:N]                  # unpack lane-dense rows
        return emb.reshape(*orig_shape, D)

    return apply


def _reference(table, indices, K, eps=1e-12):
    x = jnp.take(table, indices.reshape(-1), axis=0)
    if K is not None:
        norm = jnp.linalg.norm(x, axis=-1, keepdims=True)
        x = (x / jnp.maximum(norm, eps)) * (norm + K)
    return x.reshape(*indices.shape, table.shape[-1])


if __name__ == "__main__":
    # Deterministic parameter init (nn.Embedding ~ N(0, 1)) and example inputs.
    n_classes = 10           # labelmap.n_classes
    embedding_dim = 32
    K = 3.0

    key = jax.random.PRNGKey(0)
    k_table, k_idx, k_idx2 = jax.random.split(key, 3)
    table = jax.random.normal(k_table, (n_classes, embedding_dim), dtype=jnp.float32)

    # Primary small example: batch=2, seq=8 integer labels.
    indices = jax.random.randint(k_idx, (2, 8), 0, n_classes, dtype=jnp.int32)

    embedder = make_embedder(table, K=K)
    out = jax.block_until_ready(embedder(indices))
    ref = _reference(table, indices, K)
    assert out.shape == (2, 8, embedding_dim)
    assert jnp.allclose(out, ref, atol=1e-5, rtol=1e-5), float(jnp.max(jnp.abs(out - ref)))

    # Larger id count to exercise padding / packing path.
    indices2 = jax.random.randint(k_idx2, (5, 250), 0, n_classes, dtype=jnp.int32)
    out2 = jax.block_until_ready(embedder(indices2))
    ref2 = _reference(table, indices2, K)
    assert out2.shape == (5, 250, embedding_dim)
    assert jnp.allclose(out2, ref2, atol=1e-5, rtol=1e-5), float(jnp.max(jnp.abs(out2 - ref2)))

    # K=None branch (plain embedding lookup, no soft_clip).
    embedder_noclip = make_embedder(table, K=None)
    out3 = jax.block_until_ready(embedder_noclip(indices))
    ref3 = _reference(table, indices, None)
    assert jnp.allclose(out3, ref3, atol=1e-5, rtol=1e-5)

    print("KERNEL_OK")
</pallas_src>

<mosaic_0001>
module attributes {stable_mosaic.version = 11 : i64} {
  func.func @_embedder_kernel(%arg0: i32, %arg1: memref<4x8x1xi32, #tpu.memory_space<vmem>>, %arg2: memref<2x64x128xbf16, #tpu.memory_space<vmem>>, %arg3: memref<8x128xf32, #tpu.memory_space<vmem>>) attributes {dimension_semantics = [#tpu.dimension_semantics<parallel>], iteration_bounds = array<i64: 1>, scalar_prefetch = 0 : i64, scratch_operands = 0 : i64, tpu.core_type = #tpu.core_type<tc>, window_params = [{transform_indices = @transform_0, window_bounds = array<i64: 4, 8, 1>}, {pipeline_mode = #tpu.pipeline_mode<synchronous>, transform_indices = @transform_1, window_bounds = array<i64: 2, 64, 128>}, {transform_indices = @transform_2, window_bounds = array<i64: 8, 128>}]} {
    %0 = tpu.iota {dimensions = array<i32: 1>} : vector<8x64xi32>
    %c0 = arith.constant 0 : index
    %c0_0 = arith.constant 0 : index
    %c0_1 = arith.constant 0 : index
    %1 = vector.load %arg1[%c0, %c0_0, %c0_1] : memref<4x8x1xi32, #tpu.memory_space<vmem>>, vector<1x8x1xi32>
    %2 = vector.shape_cast %1 : vector<1x8x1xi32> to vector<8x1xi32>
    %3 = vector.broadcast %2 : vector<8x1xi32> to vector<8x64xi32>
    %4 = arith.cmpi eq, %3, %0 : vector<8x64xi32>
    %c1 = arith.constant 1 : index
    %c0_2 = arith.constant 0 : index
    %c0_3 = arith.constant 0 : index
    %5 = vector.load %arg1[%c1, %c0_2, %c0_3] : memref<4x8x1xi32, #tpu.memory_space<vmem>>, vector<1x8x1xi32>
    %6 = vector.shape_cast %5 : vector<1x8x1xi32> to vector<8x1xi32>
    %7 = vector.broadcast %6 : vector<8x1xi32> to vector<8x64xi32>
    %8 = arith.cmpi eq, %7, %0 : vector<8x64xi32>
    %9 = arith.ori %4, %8 : vector<8x64xi1>
    %c2 = arith.constant 2 : index
    %c0_4 = arith.constant 0 : index
    %c0_5 = arith.constant 0 : index
    %10 = vector.load %arg1[%c2, %c0_4, %c0_5] : memref<4x8x1xi32, #tpu.memory_space<vmem>>, vector<1x8x1xi32>
    %11 = vector.shape_cast %10 : vector<1x8x1xi32> to vector<8x1xi32>
    %12 = vector.broadcast %11 : vector<8x1xi32> to vector<8x64xi32>
    %13 = arith.cmpi eq, %12, %0 : vector<8x64xi32>
    %14 = arith.ori %9, %13 : vector<8x64xi1>
    %c3 = arith.constant 3 : index
    %c0_6 = arith.constant 0 : index
    %c0_7 = arith.constant 0 : index
    %15 = vector.load %arg1[%c3, %c0_6, %c0_7] : memref<4x8x1xi32, #tpu.memory_space<vmem>>, vector<1x8x1xi32>
    %16 = vector.shape_cast %15 : vector<1x8x1xi32> to vector<8x1xi32>
    %17 = vector.broadcast %16 : vector<8x1xi32> to vector<8x64xi32>
    %18 = arith.cmpi eq, %17, %0 : vector<8x64xi32>
    %19 = arith.ori %14, %18 : vector<8x64xi1>
    %20 = arith.extui %19 : vector<8x64xi1> to vector<8x64xi32>
    %21 = arith.sitofp %20 : vector<8x64xi32> to vector<8x64xf32>
    %22 = arith.truncf %21 : vector<8x64xf32> to vector<8x64xbf16>
    %c0_8 = arith.constant 0 : index
    %c0_9 = arith.constant 0 : index
    %c0_10 = arith.constant 0 : index
    %23 = vector.load %arg2[%c0_8, %c0_9, %c0_10] : memref<2x64x128xbf16, #tpu.memory_space<vmem>>, vector<1x64x128xbf16>
    %24 = vector.shape_cast %23 : vector<1x64x128xbf16> to vector<64x128xbf16>
    %cst = arith.constant dense<0.000000e+00> : vector<8x128xf32>
    %25 = tpu.matmul %22, %24, %cst {dimension_numbers = #tpu.dot_dimension_numbers<[1], [0], [0], [1], [0, 0, 1, 1], [], []>} : vector<8x64xbf16>, vector<64x128xbf16>, vector<8x128xf32> -> vector<8x128xf32>
    %c1_11 = arith.constant 1 : index
    %c0_12 = arith.constant 0 : index
    %c0_13 = arith.constant 0 : index
    %26 = vector.load %arg2[%c1_11, %c0_12, %c0_13] : memref<2x64x128xbf16, #tpu.memory_space<vmem>>, vector<1x64x128xbf16>
    %27 = vector.shape_cast %26 : vector<1x64x128xbf16> to vector<64x128xbf16>
    %cst_14 = arith.constant dense<0.000000e+00> : vector<8x128xf32>
    %28 = tpu.matmul %22, %27, %cst_14 {dimension_numbers = #tpu.dot_dimension_numbers<[1], [0], [0], [1], [0, 0, 1, 1], [], []>} : vector<8x64xbf16>, vector<64x128xbf16>, vector<8x128xf32> -> vector<8x128xf32>
    %29 = arith.addf %25, %28 : vector<8x128xf32>
    %c0_15 = arith.constant 0 : index
    %c0_16 = arith.constant 0 : index
    %30 = vector.load %arg3[%c0_15, %c0_16] : memref<8x128xf32, #tpu.memory_space<vmem>>, vector<8x128xf32>
    tpu.vector_store %arg3[%c0_15, %c0_16], %29 {strides = array<i32>} : memref<8x128xf32, #tpu.memory_space<vmem>>, vector<8x128xf32>,
    return
  }
  func.func @transform_0(%arg0: i32) -> (i32, i32, i32) {
    %c0_i32 = arith.constant 0 : i32
    %c0_i32_0 = arith.constant 0 : i32
    %c0_i32_1 = arith.constant 0 : i32
    return %c0_i32, %arg0, %c0_i32_0 : i32, i32, i32
  }
  func.func @transform_1(%arg0: i32) -> (i32, i32, i32) {
    %c0_i32 = arith.constant 0 : i32
    %c0_i32_0 = arith.constant 0 : i32
    %c0_i32_1 = arith.constant 0 : i32
    %c0_i32_2 = arith.constant 0 : i32
    return %c0_i32, %c0_i32_0, %c0_i32_1 : i32, i32, i32
  }
  func.func @transform_2(%arg0: i32) -> (i32, i32) {
    %c0_i32 = arith.constant 0 : i32
    %c0_i32_0 = arith.constant 0 : i32
    return %arg0, %c0_i32 : i32, i32
  }
}

</mosaic_0001>

<llo_original>
// kernel: apply.1
$region0: #{apply.1}
  #allocation0 [shape = 'u32[]', space=smem, size = 0x4, offset = 0x4, fixed_abs, tag = 'smem constant byte address 0x4 - core index']
  #allocation1 [shape = 'u32[72,128]{1,0:T(1,128)}', space=vmem, size = 0x9000, scoped, tag = 'internal scratch']
  %s0 = inlined_call_operand.vmem [shape: s32[4,8,1], index: 0, kind: input, shape index: {}]
  %s1 = inlined_call_operand.vmem [shape: bf16[2,64,128], index: 1, kind: input, shape index: {}]
  %s2 = inlined_call_operand.vmem [shape: f32[8,128], index: 2, kind: output, shape index: {}]
  %s3 = sld [smem:[#allocation0]]
  $region18: #{apply.1} parent=0
    _
  %s5 = ssub.s32 1, %s3
  %s6 = scalar_select 0, %s5, %s3
  // Predicated region
  $region2: #{apply.1} parent=0 // pred_check
    _
  $region3: #{apply.1} parent=0 // pred_check_branch
    %8 = sbr.rel (0) target = $region5
  $region4: #{apply.1} parent=0 // pred_region
    _
  $region5: #{apply.1} parent=0 // pred_fallthru
    _
  // Predicated region
  $region6: #{apply.1} parent=0 // pred_check
    _
  $region7: #{apply.1} parent=0 // pred_check_branch
    %10 = sbr.rel (0) target = $region9
  $region8: #{apply.1} parent=0 // pred_region
    _
  $region9: #{apply.1} parent=0 // pred_fallthru
    _
  %v12 = vlaneseq
  %v13 = vand.u32 %v12, 127
  %v14 = vld [vmem:[%s0] sm:$0xff]
  %15 = vset.pattern.permute.xlu0 0
  %16 = vperm.xlu0 %15, %v14
  %v17 = vpop.permute.xlu0 %16
  %vm18 = vcmp.eq.s32.totalorder %v17, %v13
  %s19 = scalar_lea.vmem %s0, 8
  %v20 = vld [vmem:[%s19] sm:$0xff]
  %21 = vset.pattern.permute.xlu0 0
  %22 = vperm.xlu0 %21, %v20
  %v23 = vpop.permute.xlu0 %22
  %vm24 = vcmp.eq.s32.totalorder %v23, %v13
  %vm25 = vmor %vm18, %vm24
  %s26 = scalar_lea.vmem %s0, 16
  %v27 = vld [vmem:[%s26] sm:$0xff]
  %28 = vset.pattern.permute.xlu0 0
  %29 = vperm.xlu0 %28, %v27
  %v30 = vpop.permute.xlu0 %29
  %vm31 = vcmp.eq.s32.totalorder %v30, %v13
  %vm32 = vmor %vm25, %vm31
  %s33 = scalar_lea.vmem %s0, 24
  %v34 = vld [vmem:[%s33] sm:$0xff]
  %35 = vset.pattern.permute.xlu0 0
  %36 = vperm.xlu0 %35, %v34
  %v37 = vpop.permute.xlu0 %36
  %vm38 = vcmp.eq.s32.totalorder %v37, %v13
  %vm39 = vmor %vm32, %vm38
  %v40 = vsel %vm39, 1, 0
  %v41 = vcvt.s32.f32 %v40
  %v42 = vpack.c.bf16 %v41, %v41
  %v43 = vld [vmem:[%s1] sm:$0xf]
  %v44 = vld [vmem:[%s1 + $0x4] sm:$0xf]
  %v45 = vld [vmem:[%s1 + $0x8] sm:$0xf]
  %v46 = vld [vmem:[%s1 + $0xc] sm:$0xf]
  %v47 = vld [vmem:[%s1 + $0x10] sm:$0xf]
  %v48 = vld [vmem:[%s1 + $0x14] sm:$0xf]
  %v49 = vld [vmem:[%s1 + $0x18] sm:$0xf]
  %v50 = vld [vmem:[%s1 + $0x1c] sm:$0xf]
  %s51 = scalar_lea.vmem %s1, 32
  %v52 = vld [vmem:[%s51] sm:$0xf]
  %v53 = vld [vmem:[%s51 + $0x4] sm:$0xf]
  %v54 = vld [vmem:[%s51 + $0x8] sm:$0xf]
  %v55 = vld [vmem:[%s51 + $0xc] sm:$0xf]
  %v56 = vld [vmem:[%s51 + $0x10] sm:$0xf]
  %v57 = vld [vmem:[%s51 + $0x14] sm:$0xf]
  %v58 = vld [vmem:[%s51 + $0x18] sm:$0xf]
  %v59 = vld [vmem:[%s51 + $0x1c] sm:$0xf]
  %v68 = vunpack.c.l.b16 %v52
  %v69 = vunpack.c.l.b16 %v53
  %v70 = vunpack.c.l.b16 %v54
  %v71 = vunpack.c.l.b16 %v55
  %v72 = vunpack.c.l.b16 %v56
  %v73 = vunpack.c.l.b16 %v57
  %v74 = vunpack.c.l.b16 %v58
  %v75 = vunpack.c.l.b16 %v59
  %v76 = vpack.c.b16 %v69, %v68
  %v77 = vpack.c.b16 %v71, %v70
  %v78 = vpack.c.b16 %v73, %v72
  %v79 = vpack.c.b16 %v75, %v74
  %vm84 = vcmask 523264
  %v86 = vsel %vm84, %v42, 0
  %88 = vmatpush.bf16.msra.mxu0 0
  %89 = vmatpush.bf16.msra.mxu0 0
  %90 = vmatpush.bf16.msra.mxu0 0
  %91 = vmatpush.bf16.msra.mxu0 0
  %92 = vmatpush.bf16.msra.mxu0 %v79
  %93 = vmatpush.bf16.msra.mxu0 %v78
  %94 = vmatpush.bf16.msra.mxu0 %v77
  %95 = vmatpush.bf16.msra.mxu0 %v76
  %96 = vmatmul.bf16.gmra.mxu0 %v86
  %v97 = vpop.f32.mrf.mxu0
  %v98 = vadd.f32 0.0, %v97
  %v99 = vpop.f32.mrf.mxu0
  %100 = vdwg.mxu0
  %v109 = vunpack.c.l.b16 %v43
  %v110 = vunpack.c.l.b16 %v44
  %v111 = vunpack.c.l.b16 %v45
  %v112 = vunpack.c.l.b16 %v46
  %v113 = vunpack.c.l.b16 %v47
  %v114 = vunpack.c.l.b16 %v48
  %v115 = vunpack.c.l.b16 %v49
  %v116 = vunpack.c.l.b16 %v50
  %v117 = vpack.c.b16 %v110, %v109
  %v118 = vpack.c.b16 %v112, %v111
  %v119 = vpack.c.b16 %v114, %v113
  %v120 = vpack.c.b16 %v116, %v115
  %125 = vmatpush.bf16.msra.mxu0 0
  %126 = vmatpush.bf16.msra.mxu0 0
  %127 = vmatpush.bf16.msra.mxu0 0
  %128 = vmatpush.bf16.msra.mxu0 0
  %129 = vmatpush.bf16.msra.mxu0 %v120
  %130 = vmatpush.bf16.msra.mxu0 %v119
  %131 = vmatpush.bf16.msra.mxu0 %v118
  %132 = vmatpush.bf16.msra.mxu0 %v117
  %133 = vmatmul.bf16.gmra.mxu0 %v86
  %v134 = vpop.f32.mrf.mxu0
  %v135 = vadd.f32 %v98, %v134
  %v136 = vpop.f32.mrf.mxu0
  %137 = vdwg.mxu0
  %138 = vst [vmem:[%s2] sm:$0xff] %v135
  // Predicated region
  $region10: #{apply.1} parent=0 // pred_check
    _
  $region11: #{apply.1} parent=0 // pred_check_branch
    %140 = sbr.rel (0) target = $region13
  $region12: #{apply.1} parent=0 // pred_region
    _
  $region13: #{apply.1} parent=0 // pred_fallthru
    _
  // Predicated region
  $region14: #{apply.1} parent=0 // pred_check
    _
  $region15: #{apply.1} parent=0 // pred_check_branch
    %142 = sbr.rel (0) target = $region17
  $region16: #{apply.1} parent=0 // pred_region
    _
  $region17: #{apply.1} parent=0 // pred_fallthru
    _

</llo_original>
